<compile_context>
chip_gen: v7x
topology: tpu7x:2x2x1
jax: 0.10.0
libtpu: 0.0.40
codegen_flags: <defaults>
</compile_context>

<pallas_src>
import jax
import jax.numpy as jnp
from jax import lax
from jax.experimental import pallas as pl
from jax.experimental.pallas import tpu as pltpu

EPS = 1e-5                    # nn.BatchNorm2d default eps
LANE = 128                    # lane width: channel padding target
ACT_DTYPE = jnp.bfloat16      # inter-stage activations + MXU operands
ACT_BYTES = 2


def _round_up(x, m):
    return (x + m - 1) // m * m


def _pad_axis(a, axis, new_size):
    if new_size == a.shape[axis]:
        return a
    pad = [(0, 0)] * a.ndim
    pad[axis] = (0, new_size - a.shape[axis])
    return jnp.pad(a, pad)


def _cparams(sem, need_bytes):
    # Per-stage VMEM budget (double-buffered blocks + scratch) with headroom,
    # capped at 48 MiB so the same tiles also fit v7x's 64 MiB physical VMEM.
    limit = min(48 << 20, max(32 << 20, int(need_bytes * 1.5) + (4 << 20)))
    return pltpu.CompilerParams(dimension_semantics=sem, vmem_limit_bytes=limit)


def _bn_scale_shift(pstats, count, gamma, beta):
    """Fold train-mode BN into per-channel scale/shift from (sum, sum_sq) partials.

    One-pass E[x^2]-mean^2 in f32 (clamped >= 0); switch to Welford/centered
    partials if the tolerance ever tightens.
    """
    s = jnp.sum(pstats.reshape(-1, 2, pstats.shape[-1]), axis=0)     # (2, C)
    mean = s[0] / count
    var = jnp.maximum(s[1] / count - mean * mean, 0.0)
    inv = lax.rsqrt(var + EPS)
    scale = gamma * inv
    shift = beta - mean * scale
    return scale.reshape(1, -1), shift.reshape(1, -1)


# ------------------------------ kernels --------------------------------------


def _matmul_stats_kernel(x_ref, w_ref, o_ref, ps_ref):
    """1x1 conv == (rows, Cin) @ (Cin, Cout); also emits per-tile sum / sum_sq."""
    h = jnp.dot(x_ref[...], w_ref[...], preferred_element_type=jnp.float32)
    o_ref[...] = h.astype(o_ref.dtype)
    s = jnp.sum(h, axis=0, keepdims=True)
    sq = jnp.sum(h * h, axis=0, keepdims=True)
    ps_ref[...] = jnp.concatenate([s, sq], axis=0).reshape(1, 2, -1)


def _bn_matmul_stats_kernel(h_ref, scale_ref, shift_ref, w_ref, o_ref, ps_ref):
    """Folded BN + ReLU (f32 VPU), then 1x1 conv matmul (bf16 MXU); per-tile stats."""
    a = jnp.maximum(h_ref[...].astype(jnp.float32) * scale_ref[...]
                    + shift_ref[...], 0.0)
    h = jnp.dot(a.astype(w_ref.dtype), w_ref[...],
                preferred_element_type=jnp.float32)
    o_ref[...] = h.astype(o_ref.dtype)
    s = jnp.sum(h, axis=0, keepdims=True)
    sq = jnp.sum(h * h, axis=0, keepdims=True)
    ps_ref[...] = jnp.concatenate([s, sq], axis=0).reshape(1, 2, -1)


def _dilated_conv3x3_kernel(top_ref, cur_ref, bot_ref, scale_ref, shift_ref,
                            w2_ref, o_ref, ps_ref, apad_ref):
    """BN1+ReLU, dilated 3x3 conv as 9 accumulating matmuls, per-tile stats."""
    i = pl.program_id(1)
    n_h = pl.num_programs(1)
    TH, W, P = cur_ref.shape[1], cur_ref.shape[2], cur_ref.shape[3]
    d = top_ref.shape[1]
    scale = scale_ref[...]
    shift = shift_ref[...]

    def bn_relu(v):
        return jnp.maximum(v.astype(jnp.float32) * scale + shift, 0.0)

    # --- assemble BN1+ReLU activation into the zero-padded window ------------
    # Only the left/right halo *columns* need explicit zeros; the row halos are
    # real data masked at the image top/bottom.  (Kept inline each iteration:
    # hoisting would need a per-core first-iteration flag, see header note.)
    zero_cols = jnp.zeros((TH + 2 * d, d, P), jnp.float32)
    apad_ref[:, 0:d, :] = zero_cols
    apad_ref[:, d + W:d + W + d, :] = zero_cols

    apad_ref[0:d, d:d + W, :] = jnp.where(i > 0, bn_relu(top_ref[0]), 0.0)
    apad_ref[d + TH:d + TH + d, d:d + W, :] = (
        jnp.where(i < n_h - 1, bn_relu(bot_ref[0]), 0.0))
    apad_ref[d:d + TH, d:d + W, :] = bn_relu(cur_ref[0])

    # --- dilated 3x3 conv: 9 accumulating matmuls, no im2col slab ------------
    acc = jnp.zeros((TH * W, P), jnp.float32)
    t = 0
    for ky in range(3):
        for kx in range(3):
            tap = apad_ref[ky * d:ky * d + TH, kx * d:kx * d + W, :]
            tap = tap.reshape(TH * W, P).astype(w2_ref.dtype)
            acc = acc + jnp.dot(tap, w2_ref[t * P:(t + 1) * P, :],
                                preferred_element_type=jnp.float32)
            t += 1

    o_ref[...] = acc.reshape(1, TH, W, P).astype(o_ref.dtype)
    s = jnp.sum(acc, axis=0, keepdims=True)
    sq = jnp.sum(acc * acc, axis=0, keepdims=True)
    ps_ref[...] = jnp.concatenate([s, sq], axis=0).reshape(1, 1, 2, P)


def _bn_residual_kernel(h_ref, scale_ref, shift_ref, x_ref, o_ref):
    """BN3 (folded) + identity residual + ReLU (all f32 VPU math)."""
    o_ref[...] = jnp.maximum(
        h_ref[...].astype(jnp.float32) * scale_ref[...] + shift_ref[...]
        + x_ref[...].astype(jnp.float32), 0.0)


# ------------------------------ wrapper ---------------------------------------


def bottleneck_forward(x_nchw, params, dilation, *, row_tile=None, h_tile=None):
    """params = (w1, g1, b1, w2, g2, b2, w3, g3, b3) in PyTorch layouts (OIHW)."""
    w1, g1, b1, w2, g2, b2, w3, g3, b3 = params
    N, Cin, H, W = x_nchw.shape
    P = w1.shape[0]
    Cout = w3.shape[0]
    d = int(dilation)
    assert Cout == Cin, "identity residual requires inplanes == planes * 4"
    assert H % d == 0, "H must be divisible by dilation (pad otherwise)"

    Cp = _round_up(Cin, LANE)          # padded in/out channels (Cin == Cout)
    Pp = _round_up(P, LANE)            # padded bottleneck width

    M = N * H * W
    assert M % 16 == 0
    if row_tile is None:
        cands = [t for t in (512, 256, 128, 64, 32, 16) if M % t == 0]
        row_tile = next((t for t in cands if M // t >= 2), cands[-1])
    TM = row_tile
    assert M % TM == 0 and TM % 16 == 0

    if h_tile is None:
        cands = [t for t in range(d, H + 1, d) if H % t == 0]
        fits = [t for t in cands if t * W * Pp * ACT_BYTES <= (2 << 20)]
        good = [t for t in fits if H // t >= 2]
        h_tile = max(good) if good else (max(fits) if fits else cands[0])
    TH = h_tile
    assert TH % d == 0 and H % TH == 0

    # ---- layout / padding prep (NCHW -> NHWC, channels padded to lanes) -----
    # TODO(synk): if the surrounding model runs NHWC with 128-multiple widths
    #             these transposes / pads disappear entirely.
    x_nhwc = jnp.transpose(x_nchw, (0, 2, 3, 1))
    x2 = _pad_axis(x_nhwc, 3, Cp).reshape(M, Cp).astype(ACT_DTYPE)

    w1p = _pad_axis(_pad_axis(jnp.transpose(w1[:, :, 0, 0]), 0, Cp), 1, Pp
                    ).astype(ACT_DTYPE)                                  # (Cp, Pp)
    w2k = jnp.transpose(w2, (2, 3, 1, 0))                                # (ky,kx,ci,co)
    w2p = _pad_axis(_pad_axis(w2k, 2, Pp), 3, Pp).reshape(9 * Pp, Pp
                    ).astype(ACT_DTYPE)                                  # (9*Pp, Pp)
    w3p = _pad_axis(_pad_axis(jnp.transpose(w3[:, :, 0, 0]), 0, Pp), 1, Cp
                    ).astype(ACT_DTYPE)                                  # (Pp, Cp)
    g1p, b1p = _pad_axis(g1, 0, Pp), _pad_axis(b1, 0, Pp)
    g2p, b2p = _pad_axis(g2, 0, Pp), _pad_axis(b2, 0, Pp)
    g3p, b3p = _pad_axis(g3, 0, Cp), _pad_axis(b3, 0, Cp)

    n_m = M // TM
    count = float(M)
    F4 = 4

    # ---- stage 1: conv1 (1x1) + stats1 --------------------------------------
    conv1_need = 2 * (TM * Cp * ACT_BYTES + Cp * Pp * ACT_BYTES
                      + TM * Pp * ACT_BYTES + 2 * Pp * F4)
    conv1 = pl.pallas_call(
        _matmul_stats_kernel,
        out_shape=(jax.ShapeDtypeStruct((M, Pp), ACT_DTYPE),
                   jax.ShapeDtypeStruct((n_m, 2, Pp), jnp.float32)),
        grid_spec=pltpu.PrefetchScalarGridSpec(
            num_scalar_prefetch=0, grid=(n_m,),
            in_specs=[pl.BlockSpec((TM, Cp), lambda i: (i, 0)),
                      pl.BlockSpec((Cp, Pp), lambda i: (0, 0))],
            out_specs=[pl.BlockSpec((TM, Pp), lambda i: (i, 0)),
                       pl.BlockSpec((1, 2, Pp), lambda i: (i, 0, 0))]),
        compiler_params=_cparams(("parallel",), conv1_need),
    )
    h1, ps1 = conv1(x2, w1p)
    scale1, shift1 = _bn_scale_shift(ps1, count, g1p, b1p)

    # ---- stage 2: BN1+ReLU -> dilated 3x3 conv + stats2 ---------------------
    n_h = H // TH
    k = TH // d            # halo block index stride (halo blocks are d rows)
    nbh = H // d           # number of d-row halo blocks along H
    h1_nhwc = h1.reshape(N, H, W, Pp)

    conv2_need = (2 * ((2 * d + TH) * W * Pp * ACT_BYTES      # top + cur + bot
                       + 2 * Pp * F4                          # scale, shift
                       + 9 * Pp * Pp * ACT_BYTES              # w2
                       + TH * W * Pp * ACT_BYTES + 2 * Pp * F4)
                  + (TH + 2 * d) * (W + 2 * d) * Pp * F4)     # apad scratch
    conv2 = pl.pallas_call(
        _dilated_conv3x3_kernel,
        out_shape=(jax.ShapeDtypeStruct((N, H, W, Pp), ACT_DTYPE),
                   jax.ShapeDtypeStruct((N, n_h, 2, Pp), jnp.float32)),
        grid_spec=pltpu.PrefetchScalarGridSpec(
            num_scalar_prefetch=0, grid=(N, n_h),
            in_specs=[
                # top halo: d rows just above this tile (clamped; masked in-kernel)
                pl.BlockSpec((1, d, W, Pp),
                             lambda n, i: (n, jnp.maximum(i * k - 1, 0), 0, 0)),
                # current TH-row tile
                pl.BlockSpec((1, TH, W, Pp), lambda n, i: (n, i, 0, 0)),
                # bottom halo: d rows just below this tile (clamped; masked)
                pl.BlockSpec((1, d, W, Pp),
                             lambda n, i: (n, jnp.minimum(i * k + k, nbh - 1), 0, 0)),
                pl.BlockSpec((1, Pp), lambda n, i: (0, 0)),
                pl.BlockSpec((1, Pp), lambda n, i: (0, 0)),
                pl.BlockSpec((9 * Pp, Pp), lambda n, i: (0, 0)),
            ],
            out_specs=[pl.BlockSpec((1, TH, W, Pp), lambda n, i: (n, i, 0, 0)),
                       pl.BlockSpec((1, 1, 2, Pp), lambda n, i: (n, i, 0, 0))],
            scratch_shapes=[pltpu.VMEM((TH + 2 * d, W + 2 * d, Pp), jnp.float32)]),
        compiler_params=_cparams(("parallel", "parallel"), conv2_need),
    )
    h2, ps2 = conv2(h1_nhwc, h1_nhwc, h1_nhwc, scale1, shift1, w2p)
    scale2, shift2 = _bn_scale_shift(ps2, count, g2p, b2p)

    # ---- stage 3: BN2+ReLU -> conv3 (1x1) + stats3 ---------------------------
    h2f = h2.reshape(M, Pp)
    conv3_need = 2 * (TM * Pp * ACT_BYTES + 2 * Pp * F4 + Pp * Cp * ACT_BYTES
                      + TM * Cp * ACT_BYTES + 2 * Cp * F4)
    conv3 = pl.pallas_call(
        _bn_matmul_stats_kernel,
        out_shape=(jax.ShapeDtypeStruct((M, Cp), ACT_DTYPE),
                   jax.ShapeDtypeStruct((n_m, 2, Cp), jnp.float32)),
        grid_spec=pltpu.PrefetchScalarGridSpec(
            num_scalar_prefetch=0, grid=(n_m,),
            in_specs=[pl.BlockSpec((TM, Pp), lambda i: (i, 0)),
                      pl.BlockSpec((1, Pp), lambda i: (0, 0)),
                      pl.BlockSpec((1, Pp), lambda i: (0, 0)),
                      pl.BlockSpec((Pp, Cp), lambda i: (0, 0))],
            out_specs=[pl.BlockSpec((TM, Cp), lambda i: (i, 0)),
                       pl.BlockSpec((1, 2, Cp), lambda i: (i, 0, 0))]),
        compiler_params=_cparams(("parallel",), conv3_need),
    )
    h3, ps3 = conv3(h2f, scale2, shift2, w3p)
    scale3, shift3 = _bn_scale_shift(ps3, count, g3p, b3p)

    # ---- stage 4: BN3 + identity residual + ReLU -----------------------------
    final_need = 2 * (2 * TM * Cp * ACT_BYTES + 2 * Cp * F4 + TM * Cp * F4)
    final = pl.pallas_call(
        _bn_residual_kernel,
        out_shape=jax.ShapeDtypeStruct((M, Cp), jnp.float32),
        grid_spec=pltpu.PrefetchScalarGridSpec(
            num_scalar_prefetch=0, grid=(n_m,),
            in_specs=[pl.BlockSpec((TM, Cp), lambda i: (i, 0)),
                      pl.BlockSpec((1, Cp), lambda i: (0, 0)),
                      pl.BlockSpec((1, Cp), lambda i: (0, 0)),
                      pl.BlockSpec((TM, Cp), lambda i: (i, 0))],
            out_specs=pl.BlockSpec((TM, Cp), lambda i: (i, 0))),
        compiler_params=_cparams(("parallel",), final_need),
    )
    out_flat = final(h3, scale3, shift3, x2)

    out = out_flat.reshape(N, H, W, Cp)[..., :Cout]
    return jnp.transpose(out, (0, 3, 1, 2))                         # back to NCHW


# ------------------------------ reference -------------------------------------


def ref_bottleneck(x, params, dilation):
    """Pure-JAX f32 reference (NCHW), mirrors PyTorch forward with train-mode BN."""
    w1, g1, b1, w2, g2, b2, w3, g3, b3 = params
    dn = ('NCHW', 'OIHW', 'NCHW')

    def bn(h, g, b):
        mean = jnp.mean(h, axis=(0, 2, 3), keepdims=True)
        var = jnp.mean((h - mean) ** 2, axis=(0, 2, 3), keepdims=True)
        return ((h - mean) / jnp.sqrt(var + EPS) * g.reshape(1, -1, 1, 1)
                + b.reshape(1, -1, 1, 1))

    out = lax.conv_general_dilated(x, w1, (1, 1), 'VALID', dimension_numbers=dn)
    out = jax.nn.relu(bn(out, g1, b1))
    out = lax.conv_general_dilated(out, w2, (1, 1),
                                   ((dilation, dilation), (dilation, dilation)),
                                   rhs_dilation=(dilation, dilation),
                                   dimension_numbers=dn)
    out = jax.nn.relu(bn(out, g2, b2))
    out = lax.conv_general_dilated(out, w3, (1, 1), 'VALID', dimension_numbers=dn)
    out = bn(out, g3, b3)
    return jax.nn.relu(out + x)


if __name__ == "__main__":
    key = jax.random.PRNGKey(0)
    ks = jax.random.split(key, 10)

    planes, dilation = 4, 8                 # dilation_ in {2,4,8}
    inplanes = planes * 4                   # identity residual: inplanes == planes*4
    N, H, W = 2, 16, 16
    Cout = planes * 4

    x = jax.random.normal(ks[0], (N, inplanes, H, W), jnp.float32)
    w1 = jax.random.normal(ks[1], (planes, inplanes, 1, 1), jnp.float32) * 0.2
    w2 = jax.random.normal(ks[2], (planes, planes, 3, 3), jnp.float32) * 0.2
    w3 = jax.random.normal(ks[3], (Cout, planes, 1, 1), jnp.float32) * 0.2
    g1 = jax.random.uniform(ks[4], (planes,), jnp.float32, 0.5, 1.5)
    b1 = jax.random.uniform(ks[5], (planes,), jnp.float32, -0.2, 0.2)
    g2 = jax.random.uniform(ks[6], (planes,), jnp.float32, 0.5, 1.5)
    b2 = jax.random.uniform(ks[7], (planes,), jnp.float32, -0.2, 0.2)
    g3 = jax.random.uniform(ks[8], (Cout,), jnp.float32, 0.5, 1.5)
    b3 = jax.random.uniform(ks[9], (Cout,), jnp.float32, -0.2, 0.2)
    params = (w1, g1, b1, w2, g2, b2, w3, g3, b3)

    # Defaults pick TM=256 (n_m=2) and TH=8 (n_h=2) at these shapes, so the
    # conv2 halo exchange and multi-tile pipelines are genuinely exercised.
    out = bottleneck_forward(x, params, dilation)
    out = jax.block_until_ready(out)

    ref = ref_bottleneck(x, params, dilation)
    assert out.shape == ref.shape == (N, Cout, H, W)

    # bf16 activations/weights through three BN'd conv stages vs an f32
    # reference: check relative Frobenius error plus a generous abs cap.
    err_max = float(jnp.max(jnp.abs(out - ref)))
    rel_fro = float(jnp.linalg.norm(out - ref) / jnp.linalg.norm(ref))
    assert rel_fro < 2e-2 and err_max < 2.5e-1, (
        f"rel_fro={rel_fro:.4e} err_max={err_max:.4e}")
    print("KERNEL_OK")
</pallas_src>

<mosaic_0001>
module attributes {stable_mosaic.version = 11 : i64} {
  func.func @_matmul_stats_kernel(%arg0: i32, %arg1: memref<256x128xbf16, #tpu.memory_space<vmem>>, %arg2: memref<128x128xbf16, #tpu.memory_space<vmem>>, %arg3: memref<256x128xbf16, #tpu.memory_space<vmem>>, %arg4: memref<1x2x128xf32, #tpu.memory_space<vmem>>) attributes {dimension_semantics = [#tpu.dimension_semantics<parallel>], iteration_bounds = array<i64: 2>, scalar_prefetch = 0 : i64, scratch_operands = 0 : i64, tpu.core_type = #tpu.core_type<tc>, window_params = [{transform_indices = @transform_0, window_bounds = array<i64: 256, 128>}, {pipeline_mode = #tpu.pipeline_mode<synchronous>, transform_indices = @transform_1, window_bounds = array<i64: 128, 128>}, {transform_indices = @transform_2, window_bounds = array<i64: 256, 128>}, {transform_indices = @transform_3, window_bounds = array<i64: 1, 2, 128>}]} {
    %c0 = arith.constant 0 : index
    %c0_0 = arith.constant 0 : index
    %0 = vector.load %arg1[%c0, %c0_0] : memref<256x128xbf16, #tpu.memory_space<vmem>>, vector<256x128xbf16>
    %c0_1 = arith.constant 0 : index
    %c0_2 = arith.constant 0 : index
    %1 = vector.load %arg2[%c0_1, %c0_2] : memref<128x128xbf16, #tpu.memory_space<vmem>>, vector<128x128xbf16>
    %cst = arith.constant dense<0.000000e+00> : vector<256x128xf32>
    %2 = tpu.matmul %0, %1, %cst {dimension_numbers = #tpu.dot_dimension_numbers<[1], [0], [0], [1], [0, 0, 1, 1], [], []>} : vector<256x128xbf16>, vector<128x128xbf16>, vector<256x128xf32> -> vector<256x128xf32>
    %3 = arith.truncf %2 : vector<256x128xf32> to vector<256x128xbf16>
    %c0_3 = arith.constant 0 : index
    %c0_4 = arith.constant 0 : index
    %4 = vector.load %arg3[%c0_3, %c0_4] : memref<256x128xbf16, #tpu.memory_space<vmem>>, vector<256x128xbf16>
    tpu.vector_store %arg3[%c0_3, %c0_4], %3 {strides = array<i32>} : memref<256x128xbf16, #tpu.memory_space<vmem>>, vector<256x128xbf16>,
    %cst_5 = arith.constant dense<0.000000e+00> : vector<128xf32>
    %5 = vector.multi_reduction <add>, %2, %cst_5 [0] : vector<256x128xf32> to vector<128xf32>
    %6 = vector.shape_cast %5 : vector<128xf32> to vector<1x128xf32>
    %7 = arith.mulf %2, %2 : vector<256x128xf32>
    %cst_6 = arith.constant dense<0.000000e+00> : vector<128xf32>
    %8 = vector.multi_reduction <add>, %7, %cst_6 [0] : vector<256x128xf32> to vector<128xf32>
    %9 = vector.shape_cast %8 : vector<128xf32> to vector<1x128xf32>
    %10 = tpu.concatenate %6, %9 in 0 : vector<1x128xf32>, vector<1x128xf32> -> vector<2x128xf32>
    %11 = vector.shape_cast %10 : vector<2x128xf32> to vector<1x2x128xf32>
    %c0_7 = arith.constant 0 : index
    %c0_8 = arith.constant 0 : index
    %c0_9 = arith.constant 0 : index
    %12 = vector.load %arg4[%c0_7, %c0_8, %c0_9] : memref<1x2x128xf32, #tpu.memory_space<vmem>>, vector<1x2x128xf32>
    tpu.vector_store %arg4[%c0_7, %c0_8, %c0_9], %11 {strides = array<i32>} : memref<1x2x128xf32, #tpu.memory_space<vmem>>, vector<1x2x128xf32>,
    return
  }
  func.func @transform_0(%arg0: i32) -> (i32, i32) {
    %c0_i32 = arith.constant 0 : i32
    %c0_i32_0 = arith.constant 0 : i32
    return %arg0, %c0_i32 : i32, i32
  }
  func.func @transform_1(%arg0: i32) -> (i32, i32) {
    %c0_i32 = arith.constant 0 : i32
    %c0_i32_0 = arith.constant 0 : i32
    %c0_i32_1 = arith.constant 0 : i32
    return %c0_i32, %c0_i32_0 : i32, i32
  }
  func.func @transform_2(%arg0: i32) -> (i32, i32) {
    %c0_i32 = arith.constant 0 : i32
    %c0_i32_0 = arith.constant 0 : i32
    return %arg0, %c0_i32 : i32, i32
  }
  func.func @transform_3(%arg0: i32) -> (i32, i32, i32) {
    %c0_i32 = arith.constant 0 : i32
    %c0_i32_0 = arith.constant 0 : i32
    %c0_i32_1 = arith.constant 0 : i32
    return %arg0, %c0_i32, %c0_i32_0 : i32, i32, i32
  }
}

</mosaic_0001>

<llo_original>
// kernel: tpu_custom_call.1
$region0: #{tpu_custom_call.1}
  #allocation0 [shape = 'u32[]', space=smem, size = 0x4, offset = 0x4, fixed_abs, tag = 'smem constant byte address 0x4 - core index']
  #allocation1 [shape = 'u32[144,128]{1,0:T(1,128)}', space=vmem, size = 0x12000, scoped, tag = 'internal scratch']
  %s0 = inlined_call_operand.hbm [shape: bf16[512,128], index: 0, kind: input, shape index: {}]
  %s1 = inlined_call_operand.hbm [shape: bf16[128,128], index: 1, kind: input, shape index: {}]
  %s2 = inlined_call_operand.hbm [shape: bf16[512,128], index: 2, kind: output, shape index: {0}]
  %s3 = inlined_call_operand.hbm [shape: f32[2,2,128], index: 3, kind: output, shape index: {1}]
  %4 = xla_tuple %s2, %s3
  %s5 = sld [smem:[#allocation0]]
  $region57: #{tpu_custom_call.1} parent=0
    _
  %s7 = ssub.s32 1, %s5
  %s8 = scalar_select 0, %s7, %s5
  $region1: #{tpu_custom_call.1} parent=0
    #allocation2 [shape = 'u8[131072]{0}', space=vmem, size = 0x20000, scoped, tag = 'input window, operand 0']
    #allocation3 [shape = 's32[2]{0}', space=sflag, size = 0x8, scoped, tag = 'scoped memory for tpu_custom_call.1']
    #allocation4 [shape = 's32[2]{0}', space=sflag, size = 0x8, scoped, tag = 'scoped memory for tpu_custom_call.1']
    #allocation5 [shape = 'u8[32768]{0}', space=vmem, size = 0x8000, scoped, tag = 'input window, operand 1, single buffered']
    #allocation6 [shape = 's32[1]{0}', space=sflag, size = 0x4, scoped, tag = 'scoped memory for tpu_custom_call.1']
    #allocation7 [shape = 'u8[131072]{0}', space=vmem, size = 0x20000, scoped, tag = 'output window, operand 0']
    #allocation8 [shape = 'u8[2048]{0}', space=vmem, size = 0x800, scoped, tag = 'output window, operand 1']
    #allocation9 [shape = 's32[2]{0}', space=sflag, size = 0x8, scoped, tag = 'scoped memory for tpu_custom_call.1']
    %9 = vsyncpa [#allocation3], 0
    %s10 = scalar_lea.sflag [#allocation3], 1
    %11 = vsyncpa %s10, 0
    %12 = vsyncpa [#allocation6], 0
    %13 = vsyncpa [#allocation4], 0
    %s14 = scalar_lea.sflag [#allocation4], 1
    %15 = vsyncpa %s14, 0
    %16 = vsyncpa [#allocation9], 0
    %s17 = scalar_lea.sflag [#allocation9], 1
    %18 = vsyncpa %s17, 0
    loop: start=0, step=1, limit=4
    $region2: #{tpu_custom_call.1} parent=1 // loop_pre_header
      _
    $region3: #{tpu_custom_call.1} parent=1 // loop_header
      %s20 = sphi 0, %s24
      %p21 = scmp.ge.s32.totalorder %s20, 4
      %s30 = sphi 0, %s32
      %s33 = sphi 0, %s30
      %s34 = sphi 0, %s33
      %s50 = sphi 0, %s34
      %s54 = sphi 0, %s54
      %s56 = sphi 0, %s54
      %s57 = sphi 0, %s56
      %s71 = sphi 0, %s57
      %s77 = sphi 0, %s79
      %s80 = sphi 0, %s77
      %s81 = sphi 0, %s80
      %s97 = sphi 0, %s81
      %s103 = sphi 0, %s105
      %s106 = sphi 0, %s103
      %s107 = sphi 0, %s106
      %s123 = sphi 0, %s107
    $region4: #{tpu_custom_call.1} parent=1 // loop_header_branch
      %23 = sbr.rel (%p21) target = $region8
    $region5: #{tpu_custom_call.1} parent=1 // loop_body
      %s25 = ssub.s32 %s20, 1
      %s26 = ssub.s32 %s20, 2
      %s27 = sadd.s32 %s20, 1
      %s28 = ssub.s32 %s20, %s27
      %p29 = scmp.eq.s32.totalorder %s28, 0
      %s31 = sadd.s32 %s30, 1
      %s32 = scalar_select %p29, %s30, %s31
      %p35 = pneg %p29
      %p36 = scmp.eq.s32.totalorder %s20, 1
      %p37 = por %p35, %p36
      %p38 = scmp.ne.s32.totalorder %s30, %s33
      %p39 = scmp.eq.s32.totalorder %s20, 0
      %p40 = por %p38, %p39
      %p41 = scmp.ne.s32.totalorder %s30, %s33
      %p42 = scmp.eq.s32.totalorder %s25, 1
      %p43 = por %p41, %p42
      %p44 = scmp.ne.s32.totalorder %s33, %s34
      %p45 = scmp.eq.s32.totalorder %s25, 0
      %p46 = por %p44, %p45
      %p47 = scmp.ne.s32.totalorder %s33, %s34
      %p48 = scmp.eq.s32.totalorder %s26, 1
      %p49 = por %p47, %p48
      %p51 = scmp.ne.s32.totalorder %s34, %s50
      %p52 = scmp.eq.s32.totalorder %s26, 0
      %p53 = por %p51, %p52
      %s55 = sadd.s32 %s54, 1
      %p58 = scmp.eq.s32.totalorder %s20, 1
      %p59 = scmp.ne.s32.totalorder %s54, %s56
      %p60 = scmp.eq.s32.totalorder %s20, 0
      %p61 = por %p59, %p60
      %p62 = scmp.ne.s32.totalorder %s54, %s56
      %p63 = scmp.eq.s32.totalorder %s25, 1
      %p64 = por %p62, %p63
      %p65 = scmp.ne.s32.totalorder %s56, %s57
      %p66 = scmp.eq.s32.totalorder %s25, 0
      %p67 = por %p65, %p66
      %p68 = scmp.ne.s32.totalorder %s56, %s57
      %p69 = scmp.eq.s32.totalorder %s26, 1
      %p70 = por %p68, %p69
      %p72 = scmp.ne.s32.totalorder %s57, %s71
      %p73 = scmp.eq.s32.totalorder %s26, 0
      %p74 = por %p72, %p73
      %s75 = ssub.s32 %s20, %s27
      %p76 = scmp.eq.s32.totalorder %s75, 0
      %s78 = sadd.s32 %s77, 1
      %s79 = scalar_select %p76, %s77, %s78
      %p82 = pneg %p76
      %p83 = scmp.eq.s32.totalorder %s20, 1
      %p84 = por %p82, %p83
      %p85 = scmp.ne.s32.totalorder %s77, %s80
      %p86 = scmp.eq.s32.totalorder %s20, 0
      %p87 = por %p85, %p86
      %p88 = scmp.ne.s32.totalorder %s77, %s80
      %p89 = scmp.eq.s32.totalorder %s25, 1
      %p90 = por %p88, %p89
      %p91 = scmp.ne.s32.totalorder %s80, %s81
      %p92 = scmp.eq.s32.totalorder %s25, 0
      %p93 = por %p91, %p92
      %p94 = scmp.ne.s32.totalorder %s80, %s81
      %p95 = scmp.eq.s32.totalorder %s26, 1
      %p96 = por %p94, %p95
      %p98 = scmp.ne.s32.totalorder %s81, %s97
      %p99 = scmp.eq.s32.totalorder %s26, 0
      %p100 = por %p98, %p99
      %s101 = ssub.s32 %s20, %s27
      %p102 = scmp.eq.s32.totalorder %s101, 0
      %s104 = sadd.s32 %s103, 1
      %s105 = scalar_select %p102, %s103, %s104
      %p108 = pneg %p102
      %p109 = scmp.eq.s32.totalorder %s20, 1
      %p110 = por %p108, %p109
      %p111 = scmp.ne.s32.totalorder %s103, %s106
      %p112 = scmp.eq.s32.totalorder %s20, 0
      %p113 = por %p111, %p112
      %p114 = scmp.ne.s32.totalorder %s103, %s106
      %p115 = scmp.eq.s32.totalorder %s25, 1
      %p116 = por %p114, %p115
      %p117 = scmp.ne.s32.totalorder %s106, %s107
      %p118 = scmp.eq.s32.totalorder %s25, 0
      %p119 = por %p117, %p118
      %p120 = scmp.ne.s32.totalorder %s106, %s107
      %p121 = scmp.eq.s32.totalorder %s26, 1
      %p122 = por %p120, %p121
      %p124 = scmp.ne.s32.totalorder %s107, %s123
      %p125 = scmp.eq.s32.totalorder %s26, 0
      %p126 = por %p124, %p125
      %p127 = scmp.le.s32.totalorder 1, %s20
      %p128 = scmp.lt.s32.totalorder %s20, 3
      %p129 = pnand %p127, %p128
      %p130 = pneg %p129
      // Predicated region
      $region9: #{tpu_custom_call.1} parent=5 // pred_check
        _
      $region10: #{tpu_custom_call.1} parent=5 // pred_check_branch
        %132 = sbr.rel (%p129) target = $region12
      $region11: #{tpu_custom_call.1} parent=5 // pred_region
        %s133 = ssub.s32 %s20, 1
        // Predicated region
        $region13: #{tpu_custom_call.1} parent=11 // pred_check
          %p134 = pneg %p67
        $region14: #{tpu_custom_call.1} parent=11 // pred_check_branch
          %136 = sbr.rel (%p134) target = $region16
        $region15: #{tpu_custom_call.1} parent=11 // pred_region
          %s138 = ssub.s32 1024, 1024
          %139 = vsyncadd [#allocation6], %s138
          %s140 = sshll.u32 [#allocation5], 4
          %s141 = int_to_ptr.vmem [resolvable:$true] %s140
          %146 = dma.hbm_to_vmem [thread:$0]  %s1, 1024, %s141, [#allocation6], 64, 64, 4
        $region16: #{tpu_custom_call.1} parent=11 // pred_fallthru
          _
      $region12: #{tpu_custom_call.1} parent=5 // pred_fallthru
        _
      %p147 = scmp.lt.s32.totalorder %s20, 2
      // Predicated region
      $region17: #{tpu_custom_call.1} parent=5 // pred_check
        %p148 = pneg %p147
      $region18: #{tpu_custom_call.1} parent=5 // pred_check_branch
        %150 = sbr.rel (%p148) target = $region20
      $region19: #{tpu_custom_call.1} parent=5 // pred_region
        // Predicated region
        $region21: #{tpu_custom_call.1} parent=19 // pred_check
          %p151 = pneg %p40
        $region22: #{tpu_custom_call.1} parent=19 // pred_check_branch
          %153 = sbr.rel (%p151) target = $region24
        $region23: #{tpu_custom_call.1} parent=19 // pred_region
          %s154 = sand.u32 %s30, 1
          %s155 = scalar_lea.sflag [#allocation3], %s154
          %s156 = sand.u32 %s30, 1
          %s157 = smul.addr %s156, 128
          %s158 = scalar_lea.vmem [#allocation2], %s157
          %s159 = smul.u32 32, %s20
          %s161 = ssub.s32 2048, 2048
          %162 = vsyncadd %s155, %s161
          %s163 = smul.addr %s159, 64
          %s164 = scalar_lea.hbm %s0, %s163
          %s165 = sshll.u32 %s158, 4
          %s166 = int_to_ptr.vmem [resolvable:$true] %s165
          %171 = dma.hbm_to_vmem [thread:$0]  %s164, 2048, %s166, %s155, 64, 64, 4
        $region24: #{tpu_custom_call.1} parent=19 // pred_fallthru
          _
      $region20: #{tpu_custom_call.1} parent=5 // pred_fallthru
        _
      %p172 = scmp.le.s32.totalorder 1, %s20
      %p173 = scmp.lt.s32.totalorder %s20, 3
      %p174 = pnand %p172, %p173
      %p175 = pneg %p174
      // Predicated region
      $region25: #{tpu_custom_call.1} parent=5 // pred_check
        _
      $region26: #{tpu_custom_call.1} parent=5 // pred_check_branch
        %177 = sbr.rel (%p174) target = $region28
      $region27: #{tpu_custom_call.1} parent=5 // pred_region
        %s178 = ssub.s32 %s20, 1
        %s179 = sand.u32 %s33, 1
        %s180 = scalar_lea.sflag [#allocation3], %s179
        %s181 = sand.u32 %s33, 1
        %s182 = smul.addr %s181, 128
        %s183 = scalar_lea.vmem [#allocation2], %s182
        // Predicated region
        $region29: #{tpu_custom_call.1} parent=27 // pred_check
          %p184 = pneg %p46
        $region30: #{tpu_custom_call.1} parent=27 // pred_check_branch
          %186 = sbr.rel (%p184) target = $region32
        $region31: #{tpu_custom_call.1} parent=27 // pred_region
          %187 = dma.done %s180, 2048
        $region32: #{tpu_custom_call.1} parent=27 // pred_fallthru
          _
        // Predicated region
        $region33: #{tpu_custom_call.1} parent=27 // pred_check
          %p188 = pneg %p67
        $region34: #{tpu_custom_call.1} parent=27 // pred_check_branch
          %190 = sbr.rel (%p188) target = $region36
        $region35: #{tpu_custom_call.1} parent=27 // pred_region
          %191 = dma.done [#allocation6], 1024
        $region36: #{tpu_custom_call.1} parent=27 // pred_fallthru
          _
        %s192 = sand.u32 %s33, 1
        %s193 = scalar_lea.sflag [#allocation3], %s192
        %s194 = sand.u32 %s33, 1
        %s195 = smul.addr %s194, 128
        %s196 = scalar_lea.vmem [#allocation2], %s195
        %p197 = pneg %p46
        %p198 = pneg %p43
        %p199 = pneg %p67
        %p200 = pneg %p64
        %p201 = pneg %p93
        %p202 = pneg %p90
        %s203 = sand.u32 %s80, 1
        %s204 = scalar_lea.sflag [#allocation4], %s203
        %s205 = sand.u32 %s80, 1
        %s206 = smul.addr %s205, 128
        %s207 = scalar_lea.vmem [#allocation7], %s206
        %p208 = pneg %p119
        %p209 = pneg %p116
        %s210 = sand.u32 %s106, 1
        %s211 = scalar_lea.sflag [#allocation9], %s210
        %s212 = sand.u32 %s106, 1
        %s213 = smul.addr %s212, 2
        %s214 = scalar_lea.vmem [#allocation8], %s213
        %s215 = smul.u32 32, %s25
        %s216 = smul.u32 32, %s25
        %v218 = vld [vmem:[%s183] sm:$0xf]
        %v219 = vld [vmem:[%s183 + $0x4] sm:$0xf]
        %v220 = vld [vmem:[%s183 + $0x8] sm:$0xf]
        %v221 = vld [vmem:[%s183 + $0xc] sm:$0xf]
        %v222 = vld [vmem:[%s183 + $0x10] sm:$0xf]
        %v223 = vld [vmem:[%s183 + $0x14] sm:$0xf]
        %v224 = vld [vmem:[%s183 + $0x18] sm:$0xf]
        %v225 = vld [vmem:[%s183 + $0x1c] sm:$0xf]
        %v226 = vld [vmem:[%s183 + $0x20] sm:$0xf]
        %v227 = vld [vmem:[%s183 + $0x24] sm:$0xf]
        %v228 = vld [vmem:[%s183 + $0x28] sm:$0xf]
        %v229 = vld [vmem:[%s183 + $0x2c] sm:$0xf]
        %v230 = vld [vmem:[%s183 + $0x30] sm:$0xf]
        %v231 = vld [vmem:[%s183 + $0x34] sm:$0xf]
        %v232 = vld [vmem:[%s183 + $0x38] sm:$0xf]
        %v233 = vld [vmem:[%s183 + $0x3c] sm:$0xf]
        %v234 = vld [vmem:[%s183 + $0x40] sm:$0xf]
        %v235 = vld [vmem:[%s183 + $0x44] sm:$0xf]
        %v236 = vld [vmem:[%s183 + $0x48] sm:$0xf]
        %v237 = vld [vmem:[%s183 + $0x4c] sm:$0xf]
        %v238 = vld [vmem:[%s183 + $0x50] sm:$0xf]
        %v239 = vld [vmem:[%s183 + $0x54] sm:$0xf]
        %v240 = vld [vmem:[%s183 + $0x58] sm:$0xf]
        %v241 = vld [vmem:[%s183 + $0x5c] sm:$0xf]
        %v242 = vld [vmem:[%s183 + $0x60] sm:$0xf]
        %v243 = vld [vmem:[%s183 + $0x64] sm:$0xf]
        %v244 = vld [vmem:[%s183 + $0x68] sm:$0xf]
        %v245 = vld [vmem:[%s183 + $0x6c] sm:$0xf]
        %v246 = vld [vmem:[%s183 + $0x70] sm:$0xf]
        %v247 = vld [vmem:[%s183 + $0x74] sm:$0xf]
        %v248 = vld [vmem:[%s183 + $0x78] sm:$0xf]
        %v249 = vld [vmem:[%s183 + $0x7c] sm:$0xf]
        %v250 = vld [vmem:[#allocation5] sm:$0xf]
        %v251 = vld [vmem:[#allocation5 + $0x4] sm:$0xf]
        %v252 = vld [vmem:[#allocation5 + $0x8] sm:$0xf]
        %v253 = vld [vmem:[#allocation5 + $0xc] sm:$0xf]
        %v254 = vld [vmem:[#allocation5 + $0x10] sm:$0xf]
        %v255 = vld [vmem:[#allocation5 + $0x14] sm:$0xf]
        %v256 = vld [vmem:[#allocation5 + $0x18] sm:$0xf]
        %v257 = vld [vmem:[#allocation5 + $0x1c] sm:$0xf]
        %v258 = vld [vmem:[#allocation5 + $0x20] sm:$0xf]
        %v259 = vld [vmem:[#allocation5 + $0x24] sm:$0xf]
        %v260 = vld [vmem:[#allocation5 + $0x28] sm:$0xf]
        %v261 = vld [vmem:[#allocation5 + $0x2c] sm:$0xf]
        %v262 = vld [vmem:[#allocation5 + $0x30] sm:$0xf]
        %v263 = vld [vmem:[#allocation5 + $0x34] sm:$0xf]
        %v264 = vld [vmem:[#allocation5 + $0x38] sm:$0xf]
        %v265 = vld [vmem:[#allocation5 + $0x3c] sm:$0xf]
        %v298 = vunpack.c.l.b16 %v218
        %v299 = vunpack.c.l.b16 %v219
        %v300 = vunpack.c.l.b16 %v220
        %v301 = vunpack.c.l.b16 %v221
        %v302 = vunpack.c.l.b16 %v222
        %v303 = vunpack.c.l.b16 %v223
        %v304 = vunpack.c.l.b16 %v224
        %v305 = vunpack.c.l.b16 %v225
        %v306 = vunpack.c.l.b16 %v226
        %v307 = vunpack.c.l.b16 %v227
        %v308 = vunpack.c.l.b16 %v228
        %v309 = vunpack.c.l.b16 %v229
        %v310 = vunpack.c.l.b16 %v230
        %v311 = vunpack.c.l.b16 %v231
        %v312 = vunpack.c.l.b16 %v232
        %v313 = vunpack.c.l.b16 %v233
        %v314 = vunpack.c.l.b16 %v234
        %v315 = vunpack.c.l.b16 %v235
        %v316 = vunpack.c.l.b16 %v236
        %v317 = vunpack.c.l.b16 %v237
        %v318 = vunpack.c.l.b16 %v238
        %v319 = vunpack.c.l.b16 %v239
        %v320 = vunpack.c.l.b16 %v240
        %v321 = vunpack.c.l.b16 %v241
        %v322 = vunpack.c.l.b16 %v242
        %v323 = vunpack.c.l.b16 %v243
        %v324 = vunpack.c.l.b16 %v244
        %v325 = vunpack.c.l.b16 %v245
        %v326 = vunpack.c.l.b16 %v246
        %v327 = vunpack.c.l.b16 %v247
        %v328 = vunpack.c.l.b16 %v248
        %v329 = vunpack.c.l.b16 %v249
        %v330 = vpack.c.b16 %v299, %v298
        %v331 = vpack.c.b16 %v301, %v300
        %v332 = vpack.c.b16 %v303, %v302
        %v333 = vpack.c.b16 %v305, %v304
        %v334 = vpack.c.b16 %v307, %v306
        %v335 = vpack.c.b16 %v309, %v308
        %v336 = vpack.c.b16 %v311, %v310
        %v337 = vpack.c.b16 %v313, %v312
        %v338 = vpack.c.b16 %v315, %v314
        %v339 = vpack.c.b16 %v317, %v316
        %v340 = vpack.c.b16 %v319, %v318
        %v341 = vpack.c.b16 %v321, %v320
        %v342 = vpack.c.b16 %v323, %v322
        %v343 = vpack.c.b16 %v325, %v324
        %v344 = vpack.c.b16 %v327, %v326
        %v345 = vpack.c.b16 %v329, %v328
        %v378 = vunpack.c.l.b16 %v250
        %v379 = vunpack.c.l.b16 %v251
        %v380 = vunpack.c.l.b16 %v252
        %v381 = vunpack.c.l.b16 %v253
        %v382 = vunpack.c.l.b16 %v254
        %v383 = vunpack.c.l.b16 %v255
        %v384 = vunpack.c.l.b16 %v256
        %v385 = vunpack.c.l.b16 %v257
        %v386 = vunpack.c.l.b16 %v258
        %v387 = vunpack.c.l.b16 %v259
        %v388 = vunpack.c.l.b16 %v260
        %v389 = vunpack.c.l.b16 %v261
        %v390 = vunpack.c.l.b16 %v262
        %v391 = vunpack.c.l.b16 %v263
        %v392 = vunpack.c.l.b16 %v264
        %v393 = vunpack.c.l.b16 %v265
        %v394 = vpack.c.b16 %v379, %v378
        %v395 = vpack.c.b16 %v381, %v380
        %v396 = vpack.c.b16 %v383, %v382
        %v397 = vpack.c.b16 %v385, %v384
        %v398 = vpack.c.b16 %v387, %v386
        %v399 = vpack.c.b16 %v389, %v388
        %v400 = vpack.c.b16 %v391, %v390
        %v401 = vpack.c.b16 %v393, %v392
        %410 = vmatprep.subr.bf16.mxu0 0
        %411 = vmatpush1.bf16.msra.mxu0 %v394
        %412 = vmatprep.subr.bf16.mxu0 0
        %413 = vmatpush1.bf16.msra.mxu0 %v395
        %414 = vmatprep.subr.bf16.mxu0 0
        %415 = vmatpush1.bf16.msra.mxu0 %v396
        %416 = vmatprep.subr.bf16.mxu0 0
        %417 = vmatpush1.bf16.msra.mxu0 %v397
        %418 = vmatprep.subr.bf16.mxu0 0
        %419 = vmatpush1.bf16.msra.mxu0 %v398
        %420 = vmatprep.subr.bf16.mxu0 0
        %421 = vmatpush1.bf16.msra.mxu0 %v399
        %422 = vmatprep.subr.bf16.mxu0 0
        %423 = vmatpush1.bf16.msra.mxu0 %v400
        %424 = vmatprep.subr.bf16.mxu0 0
        %425 = vmatpush1.bf16.msra.mxu0 %v401
        %426 = vmatprep.subr.bf16.mxu0 0
        %427 = vmatpush1.bf16.msra.mxu0 0
        %428 = vmatprep.subr.bf16.mxu0 0
        %429 = vmatpush1.bf16.msra.mxu0 0
        %430 = vmatprep.subr.bf16.mxu0 0
        %431 = vmatpush1.bf16.msra.mxu0 0
        %432 = vmatprep.subr.bf16.mxu0 0
        %433 = vmatpush1.bf16.msra.mxu0 0
        %434 = vmatprep.subr.bf16.mxu0 0
        %435 = vmatpush1.bf16.msra.mxu0 0
        %436 = vmatprep.subr.bf16.mxu0 0
        %437 = vmatpush1.bf16.msra.mxu0 0
        %438 = vmatprep.subr.bf16.mxu0 0
        %439 = vmatpush1.bf16.msra.mxu0 0
        %440 = vmatprep.subr.bf16.mxu0 0
        %441 = vmatpush1.bf16.msra.mxu0 0
        %442 = vmatprep.mubr.bf16.mxu0 0
        %443 = vmatmul.mubr.bf16.gmra.mrb[0].mxu0 %v330
        %v444 = vpop.f32.mrb[0].mxu0
        %v445 = vadd.f32 0.0, %v444
        %v446 = vpop.f32.mrb[0].mxu0
        %v447 = vpop.f32.mrb[0].mxu0
        %v448 = vadd.f32 0.0, %v447
        %v449 = vpop.f32.mrb[0].mxu0
        %450 = vmatprep.mubr.bf16.mxu0 0
        %451 = vmatmul.mubr.bf16.gmra.mrb[0].mxu0 %v331
        %v452 = vpop.f32.mrb[0].mxu0
        %v453 = vadd.f32 0.0, %v452
        %v454 = vpop.f32.mrb[0].mxu0
        %v455 = vpop.f32.mrb[0].mxu0
        %v456 = vadd.f32 0.0, %v455
        %v457 = vpop.f32.mrb[0].mxu0
        %458 = vmatprep.mubr.bf16.mxu0 0
        %459 = vmatmul.mubr.bf16.gmra.mrb[0].mxu0 %v332
        %v460 = vpop.f32.mrb[0].mxu0
        %v461 = vadd.f32 0.0, %v460
        %v462 = vpop.f32.mrb[0].mxu0
        %v463 = vpop.f32.mrb[0].mxu0
        %v464 = vadd.f32 0.0, %v463
        %v465 = vpop.f32.mrb[0].mxu0
        %466 = vmatprep.mubr.bf16.mxu0 0
        %467 = vmatmul.mubr.bf16.gmra.mrb[0].mxu0 %v333
        %v468 = vpop.f32.mrb[0].mxu0
        %v469 = vadd.f32 0.0, %v468
        %v470 = vpop.f32.mrb[0].mxu0
        %v471 = vpop.f32.mrb[0].mxu0
        %v472 = vadd.f32 0.0, %v471
        %v473 = vpop.f32.mrb[0].mxu0
        %474 = vmatprep.mubr.bf16.mxu0 0
        %475 = vmatmul.mubr.bf16.gmra.mrb[0].mxu0 %v334
        %v476 = vpop.f32.mrb[0].mxu0
        %v477 = vadd.f32 0.0, %v476
        %v478 = vpop.f32.mrb[0].mxu0
        %v479 = vpop.f32.mrb[0].mxu0
        %v480 = vadd.f32 0.0, %v479
        %v481 = vpop.f32.mrb[0].mxu0
        %482 = vmatprep.mubr.bf16.mxu0 0
        %483 = vmatmul.mubr.bf16.gmra.mrb[0].mxu0 %v335
        %v484 = vpop.f32.mrb[0].mxu0
        %v485 = vadd.f32 0.0, %v484
        %v486 = vpop.f32.mrb[0].mxu0
        %v487 = vpop.f32.mrb[0].mxu0
        %v488 = vadd.f32 0.0, %v487
        %v489 = vpop.f32.mrb[0].mxu0
        %490 = vmatprep.mubr.bf16.mxu0 0
        %491 = vmatmul.mubr.bf16.gmra.mrb[0].mxu0 %v336
        %v492 = vpop.f32.mrb[0].mxu0
        %v493 = vadd.f32 0.0, %v492
        %v494 = vpop.f32.mrb[0].mxu0
        %v495 = vpop.f32.mrb[0].mxu0
        %v496 = vadd.f32 0.0, %v495
        %v497 = vpop.f32.mrb[0].mxu0
        %498 = vmatprep.mubr.bf16.mxu0 0
        %499 = vmatmul.mubr.bf16.gmra.mrb[0].mxu0 %v337
        %v500 = vpop.f32.mrb[0].mxu0
        %v501 = vadd.f32 0.0, %v500
        %v502 = vpop.f32.mrb[0].mxu0
        %v503 = vpop.f32.mrb[0].mxu0
        %v504 = vadd.f32 0.0, %v503
        %v505 = vpop.f32.mrb[0].mxu0
        %506 = vmatprep.mubr.bf16.mxu0 0
        %507 = vmatmul.mubr.bf16.gmra.mrb[0].mxu0 %v338
        %v508 = vpop.f32.mrb[0].mxu0
        %v509 = vadd.f32 0.0, %v508
        %v510 = vpop.f32.mrb[0].mxu0
        %v511 = vpop.f32.mrb[0].mxu0
        %v512 = vadd.f32 0.0, %v511
        %v513 = vpop.f32.mrb[0].mxu0
        %514 = vmatprep.mubr.bf16.mxu0 0
        %515 = vmatmul.mubr.bf16.gmra.mrb[0].mxu0 %v339
        %v516 = vpop.f32.mrb[0].mxu0
        %v517 = vadd.f32 0.0, %v516
        %v518 = vpop.f32.mrb[0].mxu0
        %v519 = vpop.f32.mrb[0].mxu0
        %v520 = vadd.f32 0.0, %v519
        %v521 = vpop.f32.mrb[0].mxu0
        %522 = vmatprep.mubr.bf16.mxu0 0
        %523 = vmatmul.mubr.bf16.gmra.mrb[0].mxu0 %v340
        %v524 = vpop.f32.mrb[0].mxu0
        %v525 = vadd.f32 0.0, %v524
        %v526 = vpop.f32.mrb[0].mxu0
        %v527 = vpop.f32.mrb[0].mxu0
        %v528 = vadd.f32 0.0, %v527
        %v529 = vpop.f32.mrb[0].mxu0
        %530 = vmatprep.mubr.bf16.mxu0 0
        %531 = vmatmul.mubr.bf16.gmra.mrb[0].mxu0 %v341
        %v532 = vpop.f32.mrb[0].mxu0
        %v533 = vadd.f32 0.0, %v532
        %v534 = vpop.f32.mrb[0].mxu0
        %v535 = vpop.f32.mrb[0].mxu0
        %v536 = vadd.f32 0.0, %v535
        %v537 = vpop.f32.mrb[0].mxu0
        %538 = vmatprep.mubr.bf16.mxu0 0
        %539 = vmatmul.mubr.bf16.gmra.mrb[0].mxu0 %v342
        %v540 = vpop.f32.mrb[0].mxu0
        %v541 = vadd.f32 0.0, %v540
        %v542 = vpop.f32.mrb[0].mxu0
        %v543 = vpop.f32.mrb[0].mxu0
        %v544 = vadd.f32 0.0, %v543
        %v545 = vpop.f32.mrb[0].mxu0
        %546 = vmatprep.mubr.bf16.mxu0 0
        %547 = vmatmul.mubr.bf16.gmra.mrb[0].mxu0 %v343
        %v548 = vpop.f32.mrb[0].mxu0
        %v549 = vadd.f32 0.0, %v548
        %v550 = vpop.f32.mrb[0].mxu0
        %v551 = vpop.f32.mrb[0].mxu0
        %v552 = vadd.f32 0.0, %v551
        %v553 = vpop.f32.mrb[0].mxu0
        %554 = vmatprep.mubr.bf16.mxu0 0
        %555 = vmatmul.mubr.bf16.gmra.mrb[0].mxu0 %v344
        %v556 = vpop.f32.mrb[0].mxu0
        %v557 = vadd.f32 0.0, %v556
        %v558 = vpop.f32.mrb[0].mxu0
        %v559 = vpop.f32.mrb[0].mxu0
        %v560 = vadd.f32 0.0, %v559
        %v561 = vpop.f32.mrb[0].mxu0
        %562 = vmatprep.mubr.bf16.mxu0 0
        %563 = vmatmul.mubr.bf16.gmra.mrb[0].mxu0 %v345
        %v564 = vpop.f32.mrb[0].mxu0
        %v565 = vadd.f32 0.0, %v564
        %v566 = vpop.f32.mrb[0].mxu0
        %v567 = vpop.f32.mrb[0].mxu0
        %v568 = vadd.f32 0.0, %v567
        %v569 = vpop.f32.mrb[0].mxu0
        %570 = vdwg.mxu0
        %v571 = vpack.c.bf16 %v448, %v445
        %v572 = vpack.c.bf16 %v456, %v453
        %v573 = vpack.c.bf16 %v464, %v461
        %v574 = vpack.c.bf16 %v472, %v469
        %v575 = vpack.c.bf16 %v480, %v477
        %v576 = vpack.c.bf16 %v488, %v485
        %v577 = vpack.c.bf16 %v496, %v493
        %v578 = vpack.c.bf16 %v504, %v501
        %v579 = vpack.c.bf16 %v512, %v509
        %v580 = vpack.c.bf16 %v520, %v517
        %v581 = vpack.c.bf16 %v528, %v525
        %v582 = vpack.c.bf16 %v536, %v533
        %v583 = vpack.c.bf16 %v544, %v541
        %v584 = vpack.c.bf16 %v552, %v549
        %v585 = vpack.c.bf16 %v560, %v557
        %v586 = vpack.c.bf16 %v568, %v565
        %v603 = vunpack.c.l.b16 %v571
        %v604 = vunpack.c.h.b16 %v571
        %v605 = vunpack.c.l.b16 %v572
        %v606 = vunpack.c.h.b16 %v572
        %v607 = vunpack.c.l.b16 %v573
        %v608 = vunpack.c.h.b16 %v573
        %v609 = vunpack.c.l.b16 %v574
        %v610 = vunpack.c.h.b16 %v574
        %v611 = vunpack.c.l.b16 %v575
        %v612 = vunpack.c.h.b16 %v575
        %v613 = vunpack.c.l.b16 %v576
        %v614 = vunpack.c.h.b16 %v576
        %v615 = vunpack.c.l.b16 %v577
        %v616 = vunpack.c.h.b16 %v577
        %v617 = vunpack.c.l.b16 %v578
        %v618 = vunpack.c.h.b16 %v578
        %v619 = vunpack.c.l.b16 %v579
        %v620 = vunpack.c.h.b16 %v579
        %v621 = vunpack.c.l.b16 %v580
        %v622 = vunpack.c.h.b16 %v580
        %v623 = vunpack.c.l.b16 %v581
        %v624 = vunpack.c.h.b16 %v581
        %v625 = vunpack.c.l.b16 %v582
        %v626 = vunpack.c.h.b16 %v582
        %v627 = vunpack.c.l.b16 %v583
        %v628 = vunpack.c.h.b16 %v583
        %v629 = vunpack.c.l.b16 %v584
        %v630 = vunpack.c.h.b16 %v584
        %v631 = vunpack.c.l.b16 %v585
        %v632 = vunpack.c.h.b16 %v585
        %v633 = vunpack.c.l.b16 %v586
        %v634 = vunpack.c.h.b16 %v586
        %v635 = vpack.c.b16 %v603, %v603
        %v636 = vpack.c.b16 %v604, %v604
        %v637 = vpack.c.b16 %v605, %v605
        %v638 = vpack.c.b16 %v606, %v606
        %v639 = vpack.c.b16 %v607, %v607
        %v640 = vpack.c.b16 %v608, %v608
        %v641 = vpack.c.b16 %v609, %v609
        %v642 = vpack.c.b16 %v610, %v610
        %v643 = vpack.c.b16 %v611, %v611
        %v644 = vpack.c.b16 %v612, %v612
        %v645 = vpack.c.b16 %v613, %v613
        %v646 = vpack.c.b16 %v614, %v614
        %v647 = vpack.c.b16 %v615, %v615
        %v648 = vpack.c.b16 %v616, %v616
        %v649 = vpack.c.b16 %v617, %v617
        %v650 = vpack.c.b16 %v618, %v618
        %v651 = vpack.c.b16 %v619, %v619
        %v652 = vpack.c.b16 %v620, %v620
        %v653 = vpack.c.b16 %v621, %v621
        %v654 = vpack.c.b16 %v622, %v622
        %v655 = vpack.c.b16 %v623, %v623
        %v656 = vpack.c.b16 %v624, %v624
        %v657 = vpack.c.b16 %v625, %v625
        %v658 = vpack.c.b16 %v626, %v626
        %v659 = vpack.c.b16 %v627, %v627
        %v660 = vpack.c.b16 %v628, %v628
        %v661 = vpack.c.b16 %v629, %v629
        %v662 = vpack.c.b16 %v630, %v630
        %v663 = vpack.c.b16 %v631, %v631
        %v664 = vpack.c.b16 %v632, %v632
        %v665 = vpack.c.b16 %v633, %v633
        %v666 = vpack.c.b16 %v634, %v634
        %699 = vst [vmem:[%s207] sm:$0xf] %v635
        %700 = vst [vmem:[%s207 + $0x4] sm:$0xf] %v636
        %701 = vst [vmem:[%s207 + $0x8] sm:$0xf] %v637
        %702 = vst [vmem:[%s207 + $0xc] sm:$0xf] %v638
        %703 = vst [vmem:[%s207 + $0x10] sm:$0xf] %v639
        %704 = vst [vmem:[%s207 + $0x14] sm:$0xf] %v640
        %705 = vst [vmem:[%s207 + $0x18] sm:$0xf] %v641
        %706 = vst [vmem:[%s207 + $0x1c] sm:$0xf] %v642
        %707 = vst [vmem:[%s207 + $0x20] sm:$0xf] %v643
        %708 = vst [vmem:[%s207 + $0x24] sm:$0xf] %v644
        %709 = vst [vmem:[%s207 + $0x28] sm:$0xf] %v645
        %710 = vst [vmem:[%s207 + $0x2c] sm:$0xf] %v646
        %711 = vst [vmem:[%s207 + $0x30] sm:$0xf] %v647
        %712 = vst [vmem:[%s207 + $0x34] sm:$0xf] %v648
        %713 = vst [vmem:[%s207 + $0x38] sm:$0xf] %v649
        %714 = vst [vmem:[%s207 + $0x3c] sm:$0xf] %v650
        %715 = vst [vmem:[%s207 + $0x40] sm:$0xf] %v651
        %716 = vst [vmem:[%s207 + $0x44] sm:$0xf] %v652
        %717 = vst [vmem:[%s207 + $0x48] sm:$0xf] %v653
        %718 = vst [vmem:[%s207 + $0x4c] sm:$0xf] %v654
        %719 = vst [vmem:[%s207 + $0x50] sm:$0xf] %v655
        %720 = vst [vmem:[%s207 + $0x54] sm:$0xf] %v656
        %721 = vst [vmem:[%s207 + $0x58] sm:$0xf] %v657
        %722 = vst [vmem:[%s207 + $0x5c] sm:$0xf] %v658
        %723 = vst [vmem:[%s207 + $0x60] sm:$0xf] %v659
        %724 = vst [vmem:[%s207 + $0x64] sm:$0xf] %v660
        %725 = vst [vmem:[%s207 + $0x68] sm:$0xf] %v661
        %726 = vst [vmem:[%s207 + $0x6c] sm:$0xf] %v662
        %727 = vst [vmem:[%s207 + $0x70] sm:$0xf] %v663
        %728 = vst [vmem:[%s207 + $0x74] sm:$0xf] %v664
        %729 = vst [vmem:[%s207 + $0x78] sm:$0xf] %v665
        %730 = vst [vmem:[%s207 + $0x7c] sm:$0xf] %v666
        %v731 = vadd.f32 %v445, %v448
        %v732 = vadd.f32 %v731, %v453
        %v733 = vadd.f32 %v732, %v456
        %v734 = vadd.f32 %v733, %v461
        %v735 = vadd.f32 %v734, %v464
        %v736 = vadd.f32 %v735, %v469
        %v737 = vadd.f32 %v736, %v472
        %v738 = vadd.f32 %v737, %v477
        %v739 = vadd.f32 %v738, %v480
        %v740 = vadd.f32 %v739, %v485
        %v741 = vadd.f32 %v740, %v488
        %v742 = vadd.f32 %v741, %v493
        %v743 = vadd.f32 %v742, %v496
        %v744 = vadd.f32 %v743, %v501
        %v745 = vadd.f32 %v744, %v504
        %v746 = vadd.f32 %v745, %v509
        %v747 = vadd.f32 %v746, %v512
        %v748 = vadd.f32 %v747, %v517
        %v749 = vadd.f32 %v748, %v520
        %v750 = vadd.f32 %v749, %v525
        %v751 = vadd.f32 %v750, %v528
        %v752 = vadd.f32 %v751, %v533
        %v753 = vadd.f32 %v752, %v536
        %v754 = vadd.f32 %v753, %v541
        %v755 = vadd.f32 %v754, %v544
        %v756 = vadd.f32 %v755, %v549
        %v757 = vadd.f32 %v756, %v552
        %v758 = vadd.f32 %v757, %v557
        %v759 = vadd.f32 %v758, %v560
        %v760 = vadd.f32 %v759, %v565
        %v761 = vadd.f32 %v760, %v568
        %v762 = vrot.slane %v761, 4
        %v763 = vadd.f32 %v761, %v762
        %v764 = vrot.slane %v763, 2
        %v765 = vadd.f32 %v763, %v764
        %v766 = vrot.slane %v765, 1
        %v767 = vadd.f32 %v765, %v766
        %v768 = vmul.f32 %v445, %v445
        %v769 = vmul.f32 %v448, %v448
        %v770 = vmul.f32 %v453, %v453
        %v771 = vmul.f32 %v456, %v456
        %v772 = vmul.f32 %v461, %v461
        %v773 = vmul.f32 %v464, %v464
        %v774 = vmul.f32 %v469, %v469
        %v775 = vmul.f32 %v472, %v472
        %v776 = vmul.f32 %v477, %v477
        %v777 = vmul.f32 %v480, %v480
        %v778 = vmul.f32 %v485, %v485
        %v779 = vmul.f32 %v488, %v488
        %v780 = vmul.f32 %v493, %v493
        %v781 = vmul.f32 %v496, %v496
        %v782 = vmul.f32 %v501, %v501
        %v783 = vmul.f32 %v504, %v504
        %v784 = vmul.f32 %v509, %v509
        %v785 = vmul.f32 %v512, %v512
        %v786 = vmul.f32 %v517, %v517
        %v787 = vmul.f32 %v520, %v520
        %v788 = vmul.f32 %v525, %v525
        %v789 = vmul.f32 %v528, %v528
        %v790 = vmul.f32 %v533, %v533
        %v791 = vmul.f32 %v536, %v536
        %v792 = vmul.f32 %v541, %v541
        %v793 = vmul.f32 %v544, %v544
        %v794 = vmul.f32 %v549, %v549
        %v795 = vmul.f32 %v552, %v552
        %v796 = vmul.f32 %v557, %v557
        %v797 = vmul.f32 %v560, %v560
        %v798 = vmul.f32 %v565, %v565
        %v799 = vmul.f32 %v568, %v568
        %v800 = vadd.f32 %v768, %v769
        %v801 = vadd.f32 %v800, %v770
        %v802 = vadd.f32 %v801, %v771
        %v803 = vadd.f32 %v802, %v772
        %v804 = vadd.f32 %v803, %v773
        %v805 = vadd.f32 %v804, %v774
        %v806 = vadd.f32 %v805, %v775
        %v807 = vadd.f32 %v806, %v776
        %v808 = vadd.f32 %v807, %v777
        %v809 = vadd.f32 %v808, %v778
        %v810 = vadd.f32 %v809, %v779
        %v811 = vadd.f32 %v810, %v780
        %v812 = vadd.f32 %v811, %v781
        %v813 = vadd.f32 %v812, %v782
        %v814 = vadd.f32 %v813, %v783
        %v815 = vadd.f32 %v814, %v784
        %v816 = vadd.f32 %v815, %v785
        %v817 = vadd.f32 %v816, %v786
        %v818 = vadd.f32 %v817, %v787
        %v819 = vadd.f32 %v818, %v788
        %v820 = vadd.f32 %v819, %v789
        %v821 = vadd.f32 %v820, %v790
        %v822 = vadd.f32 %v821, %v791
        %v823 = vadd.f32 %v822, %v792
        %v824 = vadd.f32 %v823, %v793
        %v825 = vadd.f32 %v824, %v794
        %v826 = vadd.f32 %v825, %v795
        %v827 = vadd.f32 %v826, %v796
        %v828 = vadd.f32 %v827, %v797
        %v829 = vadd.f32 %v828, %v798
        %v830 = vadd.f32 %v829, %v799
        %v831 = vrot.slane %v830, 4
        %v832 = vadd.f32 %v830, %v831
        %v833 = vrot.slane %v832, 2
        %v834 = vadd.f32 %v832, %v833
        %v835 = vrot.slane %v834, 1
        %v836 = vadd.f32 %v834, %v835
        %vm837 = vcmask 1040384
        %v838 = vsel %vm837, %v767, %v836
        %839 = vst [vmem:[%s214] sm:$0x3] %v838
        %s840 = sand.u32 %s80, 1
        %s841 = scalar_lea.sflag [#allocation4], %s840
        %s842 = sand.u32 %s80, 1
        %s843 = smul.addr %s842, 128
        %s844 = scalar_lea.vmem [#allocation7], %s843
        %s845 = sand.u32 %s106, 1
        %s846 = scalar_lea.sflag [#allocation9], %s845
        %s847 = sand.u32 %s106, 1
        %s848 = smul.addr %s847, 2
        %s849 = scalar_lea.vmem [#allocation8], %s848
        // Predicated region
        $region37: #{tpu_custom_call.1} parent=27 // pred_check
          %p850 = pneg %p90
        $region38: #{tpu_custom_call.1} parent=27 // pred_check_branch
          %852 = sbr.rel (%p850) target = $region40
        $region39: #{tpu_custom_call.1} parent=27 // pred_region
          %s853 = smul.u32 32, %s25
          %s855 = ssub.s32 2048, 2048
          %856 = vsyncadd %s841, %s855
          %s857 = smul.addr %s853, 64
          %s858 = scalar_lea.hbm %s2, %s857
          %s859 = sshll.u32 %s844, 4
          %s860 = int_to_ptr.vmem [resolvable:$true] %s859
          %865 = dma.vmem_to_hbm [thread:$0]  %s860, 2048, %s858, %s841, 64, 64, 4
        $region40: #{tpu_custom_call.1} parent=27 // pred_fallthru
          _
        // Predicated region
        $region41: #{tpu_custom_call.1} parent=27 // pred_check
          %p866 = pneg %p116
        $region42: #{tpu_custom_call.1} parent=27 // pred_check_branch
          %868 = sbr.rel (%p866) target = $region44
        $region43: #{tpu_custom_call.1} parent=27 // pred_region
          %s870 = ssub.s32 32, 32
          %871 = vsyncadd %s846, %s870
          %s872 = smul.addr %s25, 32
          %s873 = scalar_lea.hbm %s3, %s872
          %s875 = sshll.u32 %s849, 4
          %s876 = int_to_ptr.vmem [resolvable:$true] %s875
          %878 = dma.vmem_to_hbm [thread:$0]  %s876, 32, %s873, %s846
        $region44: #{tpu_custom_call.1} parent=27 // pred_fallthru
          _
      $region28: #{tpu_custom_call.1} parent=5 // pred_fallthru
        _
      %p879 = scmp.le.s32.totalorder 2, %s20
      // Predicated region
      $region45: #{tpu_custom_call.1} parent=5 // pred_check
        %p880 = pneg %p879
      $region46: #{tpu_custom_call.1} parent=5 // pred_check_branch
        %882 = sbr.rel (%p880) target = $region48
      $region47: #{tpu_custom_call.1} parent=5 // pred_region
        %s883 = ssub.s32 %s20, 2
        // Predicated region
        $region49: #{tpu_custom_call.1} parent=47 // pred_check
          %p884 = pneg %p96
        $region50: #{tpu_custom_call.1} parent=47 // pred_check_branch
          %886 = sbr.rel (%p884) target = $region52
        $region51: #{tpu_custom_call.1} parent=47 // pred_region
          %s887 = sand.u32 %s81, 1
          %s888 = scalar_lea.sflag [#allocation4], %s887
          %s889 = sand.u32 %s81, 1
          %s890 = smul.addr %s889, 128
          %s891 = scalar_lea.vmem [#allocation7], %s890
          %892 = dma.done %s888, 2048
        $region52: #{tpu_custom_call.1} parent=47 // pred_fallthru
          _
        // Predicated region
        $region53: #{tpu_custom_call.1} parent=47 // pred_check
          %p893 = pneg %p122
        $region54: #{tpu_custom_call.1} parent=47 // pred_check_branch
          %895 = sbr.rel (%p893) target = $region56
        $region55: #{tpu_custom_call.1} parent=47 // pred_region
          %s896 = sand.u32 %s107, 1
          %s897 = scalar_lea.sflag [#allocation9], %s896
          %s898 = sand.u32 %s107, 1
          %s899 = smul.addr %s898, 2
          %s900 = scalar_lea.vmem [#allocation8], %s899
          %901 = dma.done %s897, 32
        $region56: #{tpu_custom_call.1} parent=47 // pred_fallthru
          _
      $region48: #{tpu_custom_call.1} parent=5 // pred_fallthru
        _
    $region6: #{tpu_custom_call.1} parent=1 // loop_footer
      %s24 = sadd.s32 1, %s20
    $region7: #{tpu_custom_call.1} parent=1 // loop_footer_branch
      %19 = sbr.rel target = $region3
    $region8: #{tpu_custom_call.1} parent=1 // loop_exit
      _
    %902 = vsyncpa [#allocation3], 1
    %s903 = scalar_lea.sflag [#allocation3], 1
    %904 = vsyncpa %s903, 1
    %905 = vsyncpa [#allocation6], 1
    %906 = vsyncpa [#allocation4], 1
    %s907 = scalar_lea.sflag [#allocation4], 1
    %908 = vsyncpa %s907, 1
    %909 = vsyncpa [#allocation9], 1
    %s910 = scalar_lea.sflag [#allocation9], 1
    %911 = vsyncpa %s910, 1

</llo_original>
